<compile_context>
chip_gen: v6e
topology: v6e:2x2x1
jax: 0.10.0
libtpu: 0.0.40
codegen_flags: <defaults>
</compile_context>

<pallas_src>
import functools

import jax
import jax.numpy as jnp
from jax.experimental import pallas as pl
from jax.experimental.pallas import tpu as pltpu

LANE = 128


def _dice_kernel(pred_ref, targ_ref, out_ref, acc_it, acc_st,
                 *, S_TILE, n_chan, HW, cpp, last_blk, ragged, blk_guard):
    p = pl.program_id(1)
    j = pl.program_id(2)
    blk = p * cpp + j          # logical row-block index along the HW axis

    @pl.when(j == 0)
    def _():
        acc_it[...] = jnp.zeros_like(acc_it)
        acc_st[...] = jnp.zeros_like(acc_st)

    def accumulate(masked):
        x = pred_ref[0].astype(jnp.float32)                  # (C, S_TILE, 128)
        if n_chan == 2:
            # softmax(x, axis=0)[1] == sigmoid(x1 - x0): per-lane + EUP only.
            p1 = jax.nn.sigmoid(x[1] - x[0])                 # (S_TILE, 128)
        else:
            # softmax[...,1] = 1 / sum_c exp(x_c - x_1): no cross-sublane max,
            # overflow saturates to inf -> p1 = 0 (correct limit).
            denom = jnp.sum(jnp.exp(x - x[1:2]), axis=0)     # (S_TILE, 128)
            p1 = pl.reciprocal(denom, approx=True)
        t = targ_ref[0].astype(jnp.float32)                  # (S_TILE, 128)
        if masked:
            # NaN-safe select: tail rows may hold uninitialized VMEM / zero pad.
            row = jax.lax.broadcasted_iota(jnp.int32, (S_TILE, LANE), 0)
            col = jax.lax.broadcasted_iota(jnp.int32, (S_TILE, LANE), 1)
            idx = (blk * S_TILE + row) * LANE + col
            valid = idx < HW
            p1 = jnp.where(valid, p1, 0.0)
            t = jnp.where(valid, t, 0.0)
        acc_it[...] += p1 * t
        acc_st[...] += p1 + t

    if ragged:
        # Only the last real block pays the mask; fully-out-of-range blocks
        # (clamped duplicates when P*cpp > n_blk) are skipped entirely.
        @pl.when(blk < last_blk)
        def _():
            accumulate(False)

        @pl.when(blk == last_blk)
        def _():
            accumulate(True)
    elif blk_guard:
        @pl.when(blk <= last_blk)
        def _():
            accumulate(False)
    else:
        accumulate(False)

    @pl.when(j == pl.num_programs(2) - 1)
    def _():
        it_row = jnp.sum(acc_it[...], axis=0, keepdims=True)   # (1, 128)
        st_row = jnp.sum(acc_st[...], axis=0, keepdims=True)   # (1, 128)
        out_ref[0, 0] = jnp.concatenate([it_row, st_row], axis=0)  # one store


def dice_loss(pred, target, *, max_tile_rows=4096):
    """pred: (N, C, H, W) float logits, target: (N, H, W) int/float labels."""
    N, C, H, W = pred.shape
    assert C >= 2, "dice_loss needs at least 2 channels (uses softmax[:, 1])"
    HW = H * W
    HWp = pl.cdiv(HW, LANE) * LANE
    R = HWp // LANE

    # Free row-major reshapes; pad the flat spatial axis to a lane multiple
    # only when needed (masked out in-kernel on the last block).
    pred_r = pred.reshape(N, C, HW)
    targ_r = target.reshape(N, HW)
    if HWp != HW:
        pred_r = jnp.pad(pred_r, ((0, 0), (0, 0), (0, HWp - HW)))
        targ_r = jnp.pad(targ_r, ((0, 0), (0, HWp - HW)))
    pred_r = pred_r.reshape(N, C, R, LANE)
    targ_r = targ_r.reshape(N, R, LANE)

    # Generation-aware VMEM budget: v7x has 64 MiB physical VMEM per core
    # vs 128 MiB on v5e/v6e.
    try:
        vmem_total = pltpu.get_tpu_info().vmem_capacity_bytes
    except Exception:
        vmem_total = 64 * 1024 * 1024
    if vmem_total <= 64 * 1024 * 1024:
        budget = 40 * 1024 * 1024
    else:
        budget = 96 * 1024 * 1024

    # Per-128-lane-row footprint: double-buffered pred+target blocks, the two
    # f32 accumulators, plus f32 temporaries (x cast, p1, t) as headroom.
    per_row = LANE * (2 * (C * pred.dtype.itemsize + target.dtype.itemsize)
                      + 2 * 4 + (C + 2) * 4)
    budget_rows = max(8, (budget // per_row) // 8 * 8)
    max_tile_rows = max(8, (max_tile_rows // 8) * 8)

    if R <= 8:
        S_TILE = R                                  # block dim == full array dim
    else:
        S_TILE = max(8, min(max_tile_rows, budget_rows, (R // 8) * 8))

    n_blk = pl.cdiv(R, S_TILE)
    ragged = (HW != HWp) or (R % S_TILE != 0)

    # v7x: when N is small, split the HW reduction across the 2 TensorCores.
    P = 2 if (N == 1 and n_blk >= 2) else 1
    cpp = pl.cdiv(n_blk, P)
    needs_clamp = (P * cpp) > n_blk

    def pred_map(n, p, j):
        b = p * cpp + j
        if needs_clamp:
            b = jnp.minimum(b, n_blk - 1)
        return (n, 0, b, 0)

    def targ_map(n, p, j):
        b = p * cpp + j
        if needs_clamp:
            b = jnp.minimum(b, n_blk - 1)
        return (n, b, 0)

    kernel = functools.partial(
        _dice_kernel, S_TILE=S_TILE, n_chan=C, HW=HW, cpp=cpp,
        last_blk=n_blk - 1, ragged=ragged, blk_guard=needs_clamp)

    vmem_limit = budget + (8 << 20)

    partials = pl.pallas_call(
        kernel,
        out_shape=jax.ShapeDtypeStruct((N, P, 2, LANE), jnp.float32),
        grid_spec=pltpu.PrefetchScalarGridSpec(
            num_scalar_prefetch=0,
            grid=(N, P, cpp),
            in_specs=[
                pl.BlockSpec((1, C, S_TILE, LANE), pred_map),
                pl.BlockSpec((1, S_TILE, LANE), targ_map),
            ],
            out_specs=pl.BlockSpec((1, 1, 2, LANE), lambda n, p, j: (n, p, 0, 0)),
            scratch_shapes=[pltpu.VMEM((S_TILE, LANE), jnp.float32)] * 2,
        ),
        compiler_params=pltpu.CompilerParams(
            dimension_semantics=("parallel", "parallel", "arbitrary"),
            vmem_limit_bytes=vmem_limit,
        ),
    )(pred_r, targ_r)

    # partials[..., 0, :] = per-lane intersection, partials[..., 1, :] = per-lane
    # (sum(iflat) + sum(tflat)).  Tiny scalar combine in plain JAX.
    sums = jnp.sum(partials, axis=(0, 1, 3))   # (2,)
    smooth = jnp.float32(1.0)
    return 1.0 - (2.0 * sums[0] + smooth) / (sums[1] + smooth)


def _dice_loss_ref(pred, target):
    p = jax.nn.softmax(pred.astype(jnp.float32), axis=1)[:, 1].reshape(-1)
    t = target.reshape(-1).astype(jnp.float32)
    inter = jnp.sum(p * t)
    return 1.0 - (2.0 * inter + 1.0) / (jnp.sum(p) + jnp.sum(t) + 1.0)


if __name__ == "__main__":
    key = jax.random.PRNGKey(0)
    k1, k2, k3, k4, k5, k6 = jax.random.split(key, 6)

    # Case 1: C>2 (reciprocal softmax path), N parallel, single dense block.
    pred1 = jax.random.normal(k1, (2, 4, 16, 16), dtype=jnp.float32)
    targ1 = jax.random.randint(k2, (2, 16, 16), 0, 2, dtype=jnp.int32)
    out1 = jax.block_until_ready(dice_loss(pred1, targ1))
    ref1 = jax.block_until_ready(_dice_loss_ref(pred1, targ1))
    assert jnp.allclose(out1, ref1, atol=2e-3, rtol=0), (out1, ref1)

    # Case 2: C==2 sigmoid path, N==1 -> P=2 core split, ragged last block and
    # a clamped out-of-range chunk (small max_tile_rows forces several blocks).
    pred2 = jax.random.normal(k3, (1, 2, 48, 48), dtype=jnp.float32)
    targ2 = (jax.random.uniform(k4, (1, 48, 48)) > 0.5).astype(jnp.float32)
    out2 = jax.block_until_ready(dice_loss(pred2, targ2, max_tile_rows=8))
    ref2 = jax.block_until_ready(_dice_loss_ref(pred2, targ2))
    assert jnp.allclose(out2, ref2, atol=1e-4, rtol=0), (out2, ref2)

    # Case 3: HW not a multiple of 128 (zero-pad + masked block), C=3.
    pred3 = jax.random.normal(k5, (2, 3, 10, 10), dtype=jnp.float32)
    targ3 = jax.random.randint(k6, (2, 10, 10), 0, 2, dtype=jnp.int32)
    out3 = jax.block_until_ready(dice_loss(pred3, targ3))
    ref3 = jax.block_until_ready(_dice_loss_ref(pred3, targ3))
    assert jnp.allclose(out3, ref3, atol=2e-3, rtol=0), (out3, ref3)

    print("KERNEL_OK")
</pallas_src>

<mosaic_0001>
module attributes {stable_mosaic.version = 11 : i64} {
  func.func @_dice_kernel(%arg0: i32, %arg1: i32, %arg2: i32, %arg3: memref<1x4x2x128xf32, #tpu.memory_space<vmem>>, %arg4: memref<1x2x128xi32, #tpu.memory_space<vmem>>, %arg5: memref<1x1x2x128xf32, #tpu.memory_space<vmem>>, %arg6: memref<2x128xf32, #tpu.memory_space<vmem>>, %arg7: memref<2x128xf32, #tpu.memory_space<vmem>>) attributes {dimension_semantics = [#tpu.dimension_semantics<parallel>, #tpu.dimension_semantics<parallel>, #tpu.dimension_semantics<arbitrary>], iteration_bounds = array<i64: 2, 1, 1>, scalar_prefetch = 0 : i64, scratch_operands = 2 : i64, tpu.core_type = #tpu.core_type<tc>, window_params = [{transform_indices = @transform_0, window_bounds = array<i64: 1, 4, 2, 128>}, {transform_indices = @transform_1, window_bounds = array<i64: 1, 2, 128>}, {transform_indices = @transform_2, window_bounds = array<i64: 1, 1, 2, 128>}]} {
    %c0_i32 = arith.constant 0 : i32
    %0 = arith.cmpi eq, %arg2, %c0_i32 : i32
    %1 = arith.extui %0 : i1 to i32
    %c0_i32_0 = arith.constant 0 : i32
    %2 = arith.cmpi ne, %1, %c0_i32_0 : i32
    scf.if %2 {
      %cst_17 = arith.constant 0.000000e+00 : f32
      %25 = vector.broadcast %cst_17 : f32 to vector<2x128xf32>
      %c0_18 = arith.constant 0 : index
      %c0_19 = arith.constant 0 : index
      %26 = vector.load %arg6[%c0_18, %c0_19] : memref<2x128xf32, #tpu.memory_space<vmem>>, vector<2x128xf32>
      tpu.vector_store %arg6[%c0_18, %c0_19], %25 {strides = array<i32>} : memref<2x128xf32, #tpu.memory_space<vmem>>, vector<2x128xf32>,
      %cst_20 = arith.constant 0.000000e+00 : f32
      %27 = vector.broadcast %cst_20 : f32 to vector<2x128xf32>
      %c0_21 = arith.constant 0 : index
      %c0_22 = arith.constant 0 : index
      %28 = vector.load %arg7[%c0_21, %c0_22] : memref<2x128xf32, #tpu.memory_space<vmem>>, vector<2x128xf32>
      tpu.vector_store %arg7[%c0_21, %c0_22], %27 {strides = array<i32>} : memref<2x128xf32, #tpu.memory_space<vmem>>, vector<2x128xf32>,
    } else {
    }
    %c0 = arith.constant 0 : index
    %c0_1 = arith.constant 0 : index
    %c0_2 = arith.constant 0 : index
    %c0_3 = arith.constant 0 : index
    %3 = vector.load %arg3[%c0, %c0_1, %c0_2, %c0_3] : memref<1x4x2x128xf32, #tpu.memory_space<vmem>>, vector<1x4x2x128xf32>
    %4 = vector.shape_cast %3 : vector<1x4x2x128xf32> to vector<4x2x128xf32>
    %5 = vector.extract_strided_slice %4 {offsets = [1, 0, 0], sizes = [1, 2, 128], strides = [1, 1, 1]} : vector<4x2x128xf32> to vector<1x2x128xf32>
    %6 = vector.broadcast %5 : vector<1x2x128xf32> to vector<4x2x128xf32>
    %7 = arith.subf %4, %6 : vector<4x2x128xf32>
    %8 = math.exp %7 : vector<4x2x128xf32>
    %cst = arith.constant dense<0.000000e+00> : vector<2x128xf32>
    %9 = vector.multi_reduction <add>, %8, %cst [0] : vector<4x2x128xf32> to vector<2x128xf32>
    %10 = tpu.reciprocal %9 {approx = true} : vector<2x128xf32> -> vector<2x128xf32>
    %c0_4 = arith.constant 0 : index
    %c0_5 = arith.constant 0 : index
    %c0_6 = arith.constant 0 : index
    %11 = vector.load %arg4[%c0_4, %c0_5, %c0_6] : memref<1x2x128xi32, #tpu.memory_space<vmem>>, vector<1x2x128xi32>
    %12 = vector.shape_cast %11 : vector<1x2x128xi32> to vector<2x128xi32>
    %13 = arith.sitofp %12 : vector<2x128xi32> to vector<2x128xf32>
    %c0_7 = arith.constant 0 : index
    %c0_8 = arith.constant 0 : index
    %14 = vector.load %arg6[%c0_7, %c0_8] : memref<2x128xf32, #tpu.memory_space<vmem>>, vector<2x128xf32>
    %15 = arith.mulf %10, %13 : vector<2x128xf32>
    %16 = arith.addf %14, %15 : vector<2x128xf32>
    %c0_9 = arith.constant 0 : index
    %c0_10 = arith.constant 0 : index
    %17 = vector.load %arg6[%c0_9, %c0_10] : memref<2x128xf32, #tpu.memory_space<vmem>>, vector<2x128xf32>
    tpu.vector_store %arg6[%c0_9, %c0_10], %16 {strides = array<i32>} : memref<2x128xf32, #tpu.memory_space<vmem>>, vector<2x128xf32>,
    %c0_11 = arith.constant 0 : index
    %c0_12 = arith.constant 0 : index
    %18 = vector.load %arg7[%c0_11, %c0_12] : memref<2x128xf32, #tpu.memory_space<vmem>>, vector<2x128xf32>
    %19 = arith.addf %10, %13 : vector<2x128xf32>
    %20 = arith.addf %18, %19 : vector<2x128xf32>
    %c0_13 = arith.constant 0 : index
    %c0_14 = arith.constant 0 : index
    %21 = vector.load %arg7[%c0_13, %c0_14] : memref<2x128xf32, #tpu.memory_space<vmem>>, vector<2x128xf32>
    tpu.vector_store %arg7[%c0_13, %c0_14], %20 {strides = array<i32>} : memref<2x128xf32, #tpu.memory_space<vmem>>, vector<2x128xf32>,
    %c0_i32_15 = arith.constant 0 : i32
    %22 = arith.cmpi eq, %arg2, %c0_i32_15 : i32
    %23 = arith.extui %22 : i1 to i32
    %c0_i32_16 = arith.constant 0 : i32
    %24 = arith.cmpi ne, %23, %c0_i32_16 : i32
    scf.if %24 {
      %c0_17 = arith.constant 0 : index
      %c0_18 = arith.constant 0 : index
      %25 = vector.load %arg6[%c0_17, %c0_18] : memref<2x128xf32, #tpu.memory_space<vmem>>, vector<2x128xf32>
      %cst_19 = arith.constant dense<0.000000e+00> : vector<128xf32>
      %26 = vector.multi_reduction <add>, %25, %cst_19 [0] : vector<2x128xf32> to vector<128xf32>
      %27 = vector.shape_cast %26 : vector<128xf32> to vector<1x128xf32>
      %c0_20 = arith.constant 0 : index
      %c0_21 = arith.constant 0 : index
      %28 = vector.load %arg7[%c0_20, %c0_21] : memref<2x128xf32, #tpu.memory_space<vmem>>, vector<2x128xf32>
      %cst_22 = arith.constant dense<0.000000e+00> : vector<128xf32>
      %29 = vector.multi_reduction <add>, %28, %cst_22 [0] : vector<2x128xf32> to vector<128xf32>
      %30 = vector.shape_cast %29 : vector<128xf32> to vector<1x128xf32>
      %31 = tpu.concatenate %27, %30 in 0 : vector<1x128xf32>, vector<1x128xf32> -> vector<2x128xf32>
      %c0_23 = arith.constant 0 : index
      %c0_24 = arith.constant 0 : index
      %c0_25 = arith.constant 0 : index
      %c0_26 = arith.constant 0 : index
      %32 = vector.load %arg5[%c0_23, %c0_24, %c0_25, %c0_26] : memref<1x1x2x128xf32, #tpu.memory_space<vmem>>, vector<1x1x2x128xf32>
      %33 = vector.shape_cast %32 : vector<1x1x2x128xf32> to vector<2x128xf32>
      %34 = vector.shape_cast %31 : vector<2x128xf32> to vector<1x1x2x128xf32>
      tpu.vector_store %arg5[%c0_23, %c0_24, %c0_25, %c0_26], %34 {strides = array<i32>} : memref<1x1x2x128xf32, #tpu.memory_space<vmem>>, vector<1x1x2x128xf32>,
    } else {
    }
    return
  }
  func.func @transform_0(%arg0: i32, %arg1: i32, %arg2: i32) -> (i32, i32, i32, i32) {
    %c1_i32 = arith.constant 1 : i32
    %0 = arith.muli %arg1, %c1_i32 : i32
    %1 = arith.addi %0, %arg2 : i32
    %c0_i32 = arith.constant 0 : i32
    %c0_i32_0 = arith.constant 0 : i32
    %c0_i32_1 = arith.constant 0 : i32
    return %arg0, %c0_i32, %1, %c0_i32_0 : i32, i32, i32, i32
  }
  func.func @transform_1(%arg0: i32, %arg1: i32, %arg2: i32) -> (i32, i32, i32) {
    %c1_i32 = arith.constant 1 : i32
    %0 = arith.muli %arg1, %c1_i32 : i32
    %1 = arith.addi %0, %arg2 : i32
    %c0_i32 = arith.constant 0 : i32
    %c0_i32_0 = arith.constant 0 : i32
    return %arg0, %1, %c0_i32 : i32, i32, i32
  }
  func.func @transform_2(%arg0: i32, %arg1: i32, %arg2: i32) -> (i32, i32, i32, i32) {
    %c0_i32 = arith.constant 0 : i32
    %c0_i32_0 = arith.constant 0 : i32
    %c0_i32_1 = arith.constant 0 : i32
    return %arg0, %arg1, %c0_i32, %c0_i32_0 : i32, i32, i32, i32
  }
}

</mosaic_0001>

<llo_original>
// kernel: tpu_custom_call.1
$region0: #{tpu_custom_call.1}
  #allocation0 [shape = 'u32[]', space=smem, size = 0x4, offset = 0x4, fixed_abs, tag = 'smem constant byte address 0x4 - core index']
  #allocation1 [shape = 'u32[144,128]{1,0:T(1,128)}', space=vmem, size = 0x12000, scoped, tag = 'internal scratch']
  #allocation2 [shape = 'f32[2,128]{1,0:T(2,128)}', space=vmem, size = 0x400, scoped, tag = 'scratch operand']
  #allocation3 [shape = 'f32[2,128]{1,0:T(2,128)}', space=vmem, size = 0x400, scoped, tag = 'scratch operand']
  %s0 = inlined_call_operand.hbm [shape: f32[2,4,2,128], index: 0, kind: input, shape index: {}]
  %s1 = inlined_call_operand.hbm [shape: s32[2,2,128], index: 1, kind: input, shape index: {}]
  %s2 = inlined_call_operand.hbm [shape: f32[2,1,2,128], index: 2, kind: output, shape index: {}]
  %s3 = sld [smem:[#allocation0]]
  $region57: #{tpu_custom_call.1} parent=0
    _
  %s5 = ssub.s32 1, %s3
  %s6 = scalar_select 0, %s5, %s3
  $region1: #{tpu_custom_call.1} parent=0
    #allocation4 [shape = 'u8[8192]{0}', space=vmem, size = 0x2000, scoped, tag = 'input window, operand 0']
    #allocation5 [shape = 's32[2]{0}', space=sflag, size = 0x8, scoped, tag = 'scoped memory for tpu_custom_call.1']
    #allocation6 [shape = 's32[2]{0}', space=sflag, size = 0x8, scoped, tag = 'scoped memory for tpu_custom_call.1']
    #allocation7 [shape = 'u8[2048]{0}', space=vmem, size = 0x800, scoped, tag = 'input window, operand 1']
    #allocation8 [shape = 's32[2]{0}', space=sflag, size = 0x8, scoped, tag = 'scoped memory for tpu_custom_call.1']
    #allocation9 [shape = 'u8[2048]{0}', space=vmem, size = 0x800, scoped, tag = 'output window, operand 0']
    %7 = vsyncpa [#allocation5], 0
    %s8 = scalar_lea.sflag [#allocation5], 1
    %9 = vsyncpa %s8, 0
    %10 = vsyncpa [#allocation8], 0
    %s11 = scalar_lea.sflag [#allocation8], 1
    %12 = vsyncpa %s11, 0
    %13 = vsyncpa [#allocation6], 0
    %s14 = scalar_lea.sflag [#allocation6], 1
    %15 = vsyncpa %s14, 0
    loop: start=0, step=1, limit=4
    $region2: #{tpu_custom_call.1} parent=1 // loop_pre_header
      _
    $region3: #{tpu_custom_call.1} parent=1 // loop_header
      %s17 = sphi 0, %s21
      %p18 = scmp.ge.s32.totalorder %s17, 4
      %s24 = sphi 0, %s43
      %s25 = sphi 0, %s39
      %s26 = sphi 0, %s35
      %s27 = sphi 0, %s24
      %s28 = sphi 0, %s25
      %s29 = sphi 0, %s26
      %s30 = sphi 0, %s27
      %s31 = sphi 0, %s28
      %s32 = sphi 0, %s29
      %s50 = sphi 0, %s52
      %s53 = sphi 0, %s50
      %s54 = sphi 0, %s53
      %s70 = sphi 0, %s54
      %s80 = sphi 0, %s82
      %s83 = sphi 0, %s80
      %s84 = sphi 0, %s83
      %s100 = sphi 0, %s84
      %s108 = sphi 0, %s110
      %s111 = sphi 0, %s108
      %s112 = sphi 0, %s111
      %s128 = sphi 0, %s112
    $region4: #{tpu_custom_call.1} parent=1 // loop_header_branch
      %20 = sbr.rel (%p18) target = $region8
    $region5: #{tpu_custom_call.1} parent=1 // loop_body
      %s22 = ssub.s32 %s17, 1
      %s23 = ssub.s32 %s17, 2
      %s33 = sadd.s32 1, %s26
      %p34 = scmp.ge.s32.totalorder %s33, 1
      %s35 = scalar_select %p34, 0, %s33
      %s36 = sadd.s32 1, %s25
      %s37 = scalar_select %p34, %s36, %s25
      %p38 = scmp.ge.s32.totalorder %s37, 1
      %s39 = scalar_select %p38, 0, %s37
      %s40 = sadd.s32 1, %s24
      %s41 = scalar_select %p38, %s40, %s24
      %p42 = scmp.ge.s32.totalorder %s41, 2
      %s43 = scalar_select %p42, 0, %s41
      %s44 = sadd.s32 %s25, %s26
      %s45 = sadd.s32 %s39, %s35
      %s46 = ssub.s32 %s24, %s43
      %s47 = ssub.s32 %s44, %s45
      %s48 = sor.u32 %s46, %s47
      %p49 = scmp.eq.s32.totalorder %s48, 0
      %s51 = sadd.s32 %s50, 1
      %s52 = scalar_select %p49, %s50, %s51
      %p55 = pneg %p49
      %p56 = scmp.eq.s32.totalorder %s17, 1
      %p57 = por %p55, %p56
      %p58 = scmp.ne.s32.totalorder %s50, %s53
      %p59 = scmp.eq.s32.totalorder %s17, 0
      %p60 = por %p58, %p59
      %p61 = scmp.ne.s32.totalorder %s50, %s53
      %p62 = scmp.eq.s32.totalorder %s22, 1
      %p63 = por %p61, %p62
      %p64 = scmp.ne.s32.totalorder %s53, %s54
      %p65 = scmp.eq.s32.totalorder %s22, 0
      %p66 = por %p64, %p65
      %p67 = scmp.ne.s32.totalorder %s53, %s54
      %p68 = scmp.eq.s32.totalorder %s23, 1
      %p69 = por %p67, %p68
      %p71 = scmp.ne.s32.totalorder %s54, %s70
      %p72 = scmp.eq.s32.totalorder %s23, 0
      %p73 = por %p71, %p72
      %s74 = sadd.s32 %s25, %s26
      %s75 = sadd.s32 %s39, %s35
      %s76 = ssub.s32 %s24, %s43
      %s77 = ssub.s32 %s74, %s75
      %s78 = sor.u32 %s76, %s77
      %p79 = scmp.eq.s32.totalorder %s78, 0
      %s81 = sadd.s32 %s80, 1
      %s82 = scalar_select %p79, %s80, %s81
      %p85 = pneg %p79
      %p86 = scmp.eq.s32.totalorder %s17, 1
      %p87 = por %p85, %p86
      %p88 = scmp.ne.s32.totalorder %s80, %s83
      %p89 = scmp.eq.s32.totalorder %s17, 0
      %p90 = por %p88, %p89
      %p91 = scmp.ne.s32.totalorder %s80, %s83
      %p92 = scmp.eq.s32.totalorder %s22, 1
      %p93 = por %p91, %p92
      %p94 = scmp.ne.s32.totalorder %s83, %s84
      %p95 = scmp.eq.s32.totalorder %s22, 0
      %p96 = por %p94, %p95
      %p97 = scmp.ne.s32.totalorder %s83, %s84
      %p98 = scmp.eq.s32.totalorder %s23, 1
      %p99 = por %p97, %p98
      %p101 = scmp.ne.s32.totalorder %s84, %s100
      %p102 = scmp.eq.s32.totalorder %s23, 0
      %p103 = por %p101, %p102
      %s104 = ssub.s32 %s24, %s43
      %s105 = ssub.s32 %s25, %s39
      %s106 = sor.u32 %s104, %s105
      %p107 = scmp.eq.s32.totalorder %s106, 0
      %s109 = sadd.s32 %s108, 1
      %s110 = scalar_select %p107, %s108, %s109
      %p113 = pneg %p107
      %p114 = scmp.eq.s32.totalorder %s17, 1
      %p115 = por %p113, %p114
      %p116 = scmp.ne.s32.totalorder %s108, %s111
      %p117 = scmp.eq.s32.totalorder %s17, 0
      %p118 = por %p116, %p117
      %p119 = scmp.ne.s32.totalorder %s108, %s111
      %p120 = scmp.eq.s32.totalorder %s22, 1
      %p121 = por %p119, %p120
      %p122 = scmp.ne.s32.totalorder %s111, %s112
      %p123 = scmp.eq.s32.totalorder %s22, 0
      %p124 = por %p122, %p123
      %p125 = scmp.ne.s32.totalorder %s111, %s112
      %p126 = scmp.eq.s32.totalorder %s23, 1
      %p127 = por %p125, %p126
      %p129 = scmp.ne.s32.totalorder %s112, %s128
      %p130 = scmp.eq.s32.totalorder %s23, 0
      %p131 = por %p129, %p130
      %p132 = scmp.le.s32.totalorder 1, %s17
      %p133 = scmp.lt.s32.totalorder %s17, 3
      %p134 = pnand %p132, %p133
      %p135 = pneg %p134
      // Predicated region
      $region9: #{tpu_custom_call.1} parent=5 // pred_check
        _
      $region10: #{tpu_custom_call.1} parent=5 // pred_check_branch
        %137 = sbr.rel (%p134) target = $region12
      $region11: #{tpu_custom_call.1} parent=5 // pred_region
        %s138 = ssub.s32 %s17, 1
      $region12: #{tpu_custom_call.1} parent=5 // pred_fallthru
        _
      %p139 = scmp.lt.s32.totalorder %s17, 2
      // Predicated region
      $region13: #{tpu_custom_call.1} parent=5 // pred_check
        %p140 = pneg %p139
      $region14: #{tpu_custom_call.1} parent=5 // pred_check_branch
        %142 = sbr.rel (%p140) target = $region16
      $region15: #{tpu_custom_call.1} parent=5 // pred_region
        // Predicated region
        $region17: #{tpu_custom_call.1} parent=15 // pred_check
          %p143 = pneg %p60
        $region18: #{tpu_custom_call.1} parent=15 // pred_check_branch
          %145 = sbr.rel (%p143) target = $region20
        $region19: #{tpu_custom_call.1} parent=15 // pred_region
          %s146 = sand.u32 %s50, 1
          %s147 = scalar_lea.sflag [#allocation5], %s146
          %s148 = sand.u32 %s50, 1
          %s149 = smul.addr %s148, 8
          %s150 = scalar_lea.vmem [#allocation4], %s149
          %s151 = sadd.s32 %s25, %s26
          %s153 = ssub.s32 128, 128
          %154 = vsyncadd %s147, %s153
          %s155 = smul.addr %s24, 4
          %s156 = sadd.s32 %s151, %s155
          %s157 = smul.addr %s156, 32
          %s158 = scalar_lea.hbm %s0, %s157
          %s159 = sshll.u32 %s150, 4
          %s160 = int_to_ptr.vmem [resolvable:$true] %s159
          %165 = dma.hbm_to_vmem [thread:$0]  %s158, 128, %s160, %s147, 32, 32, 2
        $region20: #{tpu_custom_call.1} parent=15 // pred_fallthru
          _
        // Predicated region
        $region21: #{tpu_custom_call.1} parent=15 // pred_check
          %p166 = pneg %p90
        $region22: #{tpu_custom_call.1} parent=15 // pred_check_branch
          %168 = sbr.rel (%p166) target = $region24
        $region23: #{tpu_custom_call.1} parent=15 // pred_region
          %s169 = sand.u32 %s80, 1
          %s170 = scalar_lea.sflag [#allocation8], %s169
          %s171 = sand.u32 %s80, 1
          %s172 = smul.addr %s171, 2
          %s173 = scalar_lea.vmem [#allocation7], %s172
          %s174 = sadd.s32 %s25, %s26
          %s176 = ssub.s32 32, 32
          %177 = vsyncadd %s170, %s176
          %s178 = sadd.s32 %s174, %s24
          %s179 = smul.addr %s178, 32
          %s180 = scalar_lea.hbm %s1, %s179
          %s182 = sshll.u32 %s173, 4
          %s183 = int_to_ptr.vmem [resolvable:$true] %s182
          %185 = dma.hbm_to_vmem [thread:$0]  %s180, 32, %s183, %s170
        $region24: #{tpu_custom_call.1} parent=15 // pred_fallthru
          _
      $region16: #{tpu_custom_call.1} parent=5 // pred_fallthru
        _
      %p186 = scmp.le.s32.totalorder 1, %s17
      %p187 = scmp.lt.s32.totalorder %s17, 3
      %p188 = pnand %p186, %p187
      %p189 = pneg %p188
      // Predicated region
      $region25: #{tpu_custom_call.1} parent=5 // pred_check
        _
      $region26: #{tpu_custom_call.1} parent=5 // pred_check_branch
        %191 = sbr.rel (%p188) target = $region28
      $region27: #{tpu_custom_call.1} parent=5 // pred_region
        %s192 = ssub.s32 %s17, 1
        %s193 = sand.u32 %s53, 1
        %s194 = scalar_lea.sflag [#allocation5], %s193
        %s195 = sand.u32 %s53, 1
        %s196 = smul.addr %s195, 8
        %s197 = scalar_lea.vmem [#allocation4], %s196
        // Predicated region
        $region29: #{tpu_custom_call.1} parent=27 // pred_check
          %p198 = pneg %p66
        $region30: #{tpu_custom_call.1} parent=27 // pred_check_branch
          %200 = sbr.rel (%p198) target = $region32
        $region31: #{tpu_custom_call.1} parent=27 // pred_region
          %201 = dma.done %s194, 128
        $region32: #{tpu_custom_call.1} parent=27 // pred_fallthru
          _
        %s202 = sand.u32 %s83, 1
        %s203 = scalar_lea.sflag [#allocation8], %s202
        %s204 = sand.u32 %s83, 1
        %s205 = smul.addr %s204, 2
        %s206 = scalar_lea.vmem [#allocation7], %s205
        // Predicated region
        $region33: #{tpu_custom_call.1} parent=27 // pred_check
          %p207 = pneg %p96
        $region34: #{tpu_custom_call.1} parent=27 // pred_check_branch
          %209 = sbr.rel (%p207) target = $region36
        $region35: #{tpu_custom_call.1} parent=27 // pred_region
          %210 = dma.done %s203, 32
        $region36: #{tpu_custom_call.1} parent=27 // pred_fallthru
          _
        %s211 = sand.u32 %s53, 1
        %s212 = scalar_lea.sflag [#allocation5], %s211
        %s213 = sand.u32 %s53, 1
        %s214 = smul.addr %s213, 8
        %s215 = scalar_lea.vmem [#allocation4], %s214
        %p216 = pneg %p66
        %p217 = pneg %p63
        %s218 = sand.u32 %s83, 1
        %s219 = scalar_lea.sflag [#allocation8], %s218
        %s220 = sand.u32 %s83, 1
        %s221 = smul.addr %s220, 2
        %s222 = scalar_lea.vmem [#allocation7], %s221
        %p223 = pneg %p96
        %p224 = pneg %p93
        %p225 = pneg %p124
        %p226 = pneg %p121
        %s227 = sand.u32 %s111, 1
        %s228 = scalar_lea.sflag [#allocation6], %s227
        %s229 = sand.u32 %s111, 1
        %s230 = smul.addr %s229, 2
        %s231 = scalar_lea.vmem [#allocation9], %s230
        %s232 = sadd.s32 %s28, %s29
        %s233 = sadd.s32 %s28, %s29
        %p234 = scmp.eq.s32.totalorder %s29, 0
        // Predicated region
        $region37: #{tpu_custom_call.1} parent=27 // pred_check
          %p235 = pneg %p234
        $region38: #{tpu_custom_call.1} parent=27 // pred_check_branch
          %237 = sbr.rel (%p235) target = $region40
        $region39: #{tpu_custom_call.1} parent=27 // pred_region
          %238 = vst [vmem:[#allocation2] sm:$0x3] 0.0
          %239 = vst [vmem:[#allocation3] sm:$0x3] 0.0
        $region40: #{tpu_custom_call.1} parent=27 // pred_fallthru
          _
        %v240 = vld [vmem:[%s197] sm:$0x3]
        %v241 = vld [vmem:[%s197 + $0x2] sm:$0x3]
        %v242 = vld [vmem:[%s197 + $0x4] sm:$0x3]
        %v243 = vld [vmem:[%s197 + $0x6] sm:$0x3]
        %v244 = vsub.f32 %v240, %v241
        %v245 = vsub.f32 %v241, %v241
        %v246 = vsub.f32 %v242, %v241
        %v247 = vsub.f32 %v243, %v241
        %v248 = vmul.f32 %v244, 1.442695
        %v249 = vpow.pop %v248
        %v250 = vmul.f32 %v245, 1.442695
        %v251 = vpow.pop %v250
        %v252 = vmul.f32 %v246, 1.442695
        %v253 = vpow.pop %v252
        %v254 = vmul.f32 %v247, 1.442695
        %v255 = vpow.pop %v254
        %vm256 = vcmask 1041408
        %v257 = vsel %vm256, %v249, 0.0
        %v258 = vsel %vm256, %v251, 0.0
        %v259 = vadd.f32 %v257, %v258
        %v260 = vsel %vm256, %v253, 0.0
        %v261 = vadd.f32 %v259, %v260
        %v262 = vsel %vm256, %v255, 0.0
        %v263 = vadd.f32 %v261, %v262
        %v264 = vrcp.pop %v263
        %v265 = vld [vmem:[%s206] sm:$0x3]
        %v266 = vcvt.s32.f32 %v265
        %v267 = vld [vmem:[#allocation2] sm:$0x3]
        %v268 = vmul.f32 %v264, %v266
        %v269 = vadd.f32 %v267, %v268
        %270 = vst [vmem:[#allocation2] sm:$0x3] %v269
        %v271 = vld [vmem:[#allocation3] sm:$0x3]
        %v272 = vadd.f32 %v264, %v266
        %v273 = vadd.f32 %v271, %v272
        %274 = vst [vmem:[#allocation3] sm:$0x3] %v273
        // Predicated region
        $region41: #{tpu_custom_call.1} parent=27 // pred_check
          %p275 = pneg %p234
        $region42: #{tpu_custom_call.1} parent=27 // pred_check_branch
          %277 = sbr.rel (%p275) target = $region44
        $region43: #{tpu_custom_call.1} parent=27 // pred_region
          %v278 = vld [vmem:[#allocation2] sm:$0x3]
          %v279 = vsel %vm256, %v278, 0.0
          %v280 = vrot.slane %v279, 4
          %v281 = vadd.f32 %v279, %v280
          %v282 = vrot.slane %v281, 2
          %v283 = vadd.f32 %v281, %v282
          %v284 = vrot.slane %v283, 1
          %v285 = vadd.f32 %v283, %v284
          %v286 = vld [vmem:[#allocation3] sm:$0x3]
          %v287 = vsel %vm256, %v286, 0.0
          %v288 = vrot.slane %v287, 4
          %v289 = vadd.f32 %v287, %v288
          %v290 = vrot.slane %v289, 2
          %v291 = vadd.f32 %v289, %v290
          %v292 = vrot.slane %v291, 1
          %v293 = vadd.f32 %v291, %v292
          %vm294 = vcmask 1040384
          %v295 = vsel %vm294, %v285, %v293
          %296 = vst [vmem:[%s231] sm:$0x3] %v295
        $region44: #{tpu_custom_call.1} parent=27 // pred_fallthru
          _
        %s297 = sand.u32 %s111, 1
        %s298 = scalar_lea.sflag [#allocation6], %s297
        %s299 = sand.u32 %s111, 1
        %s300 = smul.addr %s299, 2
        %s301 = scalar_lea.vmem [#allocation9], %s300
        // Predicated region
        $region45: #{tpu_custom_call.1} parent=27 // pred_check
          %p302 = pneg %p121
        $region46: #{tpu_custom_call.1} parent=27 // pred_check_branch
          %304 = sbr.rel (%p302) target = $region48
        $region47: #{tpu_custom_call.1} parent=27 // pred_region
          %s306 = ssub.s32 32, 32
          %307 = vsyncadd %s298, %s306
          %s308 = sadd.s32 %s28, %s27
          %s309 = smul.addr %s308, 32
          %s310 = scalar_lea.hbm %s2, %s309
          %s312 = sshll.u32 %s301, 4
          %s313 = int_to_ptr.vmem [resolvable:$true] %s312
          %315 = dma.vmem_to_hbm [thread:$0]  %s313, 32, %s310, %s298
        $region48: #{tpu_custom_call.1} parent=27 // pred_fallthru
          _
      $region28: #{tpu_custom_call.1} parent=5 // pred_fallthru
        _
      %p316 = scmp.le.s32.totalorder 2, %s17
      // Predicated region
      $region49: #{tpu_custom_call.1} parent=5 // pred_check
        %p317 = pneg %p316
      $region50: #{tpu_custom_call.1} parent=5 // pred_check_branch
        %319 = sbr.rel (%p317) target = $region52
      $region51: #{tpu_custom_call.1} parent=5 // pred_region
        %s320 = ssub.s32 %s17, 2
        // Predicated region
        $region53: #{tpu_custom_call.1} parent=51 // pred_check
          %p321 = pneg %p127
        $region54: #{tpu_custom_call.1} parent=51 // pred_check_branch
          %323 = sbr.rel (%p321) target = $region56
        $region55: #{tpu_custom_call.1} parent=51 // pred_region
          %s324 = sand.u32 %s112, 1
          %s325 = scalar_lea.sflag [#allocation6], %s324
          %s326 = sand.u32 %s112, 1
          %s327 = smul.addr %s326, 2
          %s328 = scalar_lea.vmem [#allocation9], %s327
          %329 = dma.done %s325, 32
        $region56: #{tpu_custom_call.1} parent=51 // pred_fallthru
          _
      $region52: #{tpu_custom_call.1} parent=5 // pred_fallthru
        _
    $region6: #{tpu_custom_call.1} parent=1 // loop_footer
      %s21 = sadd.s32 1, %s17
    $region7: #{tpu_custom_call.1} parent=1 // loop_footer_branch
      %16 = sbr.rel target = $region3
    $region8: #{tpu_custom_call.1} parent=1 // loop_exit
      _
    %330 = vsyncpa [#allocation5], 1
    %s331 = scalar_lea.sflag [#allocation5], 1
    %332 = vsyncpa %s331, 1
    %333 = vsyncpa [#allocation8], 1
    %s334 = scalar_lea.sflag [#allocation8], 1
    %335 = vsyncpa %s334, 1
    %336 = vsyncpa [#allocation6], 1
    %s337 = scalar_lea.sflag [#allocation6], 1
    %338 = vsyncpa %s337, 1

</llo_original>
